<compile_context>
chip_gen: v6e
topology: v6e:2x2x1
jax: 0.10.0
libtpu: 0.0.40
codegen_flags: <defaults>
</compile_context>

<pallas_src>
import jax
import jax.numpy as jnp
from jax.experimental import pallas as pl
from jax.experimental.pallas import tpu as pltpu


# ---------------------------------------------------------------------------
# Fused Pallas kernel: SAGEConv(mean) + ReLU + Linear head + mean over nodes
# ---------------------------------------------------------------------------
def _sage_encoder_kernel(adj_ref, x_ref, wl_ref, bl_ref, wr_ref, w2_ref, b2_ref,
                         out_ref):
    """One target-node tile per grid step.

    adj_ref : [TI, N]  bf16 adjacency counts for this tile's targets
    x_ref   : [N, FIN] f32 node features (grid-invariant, resident)
    wl_ref  : [FIN, HID]  lin_l weight (applied to aggregated neighbors)
    bl_ref  : [1, HID]    lin_l bias
    wr_ref  : [FIN, HID]  lin_r weight (applied to the root node, no bias)
    w2_ref  : [HID, OUT]  Linear1 weight
    b2_ref  : [1, OUT]    Linear1 bias
    out_ref : [1, OUT]    accumulator across the grid -> final node-mean
    """
    i = pl.program_id(0)
    n_tiles = pl.num_programs(0)
    ti = adj_ref.shape[0]
    n_total = x_ref.shape[0]

    # ---- mean aggregation of neighbor features (adj is {0,1,...} counts) ----
    adj = adj_ref[...].astype(jnp.float32)                       # [TI, N]
    deg = jnp.sum(adj, axis=-1, keepdims=True)                   # [TI, 1]
    has_nbr = jnp.where(deg > 0.0, 1.0, 0.0)
    inv_deg = has_nbr * pl.reciprocal(jnp.maximum(deg, 1.0), approx=True)
    agg = jnp.dot(adj, x_ref[...],
                  preferred_element_type=jnp.float32) * inv_deg  # [TI, FIN]

    # ---- root-node features for this tile (sliced from resident x) ----
    row0 = pl.multiple_of(i * ti, ti)
    x_self = x_ref[pl.ds(row0, ti), :]                           # [TI, FIN]

    # ---- SAGEConv projections + fused ReLU ----
    h = (jnp.dot(agg, wl_ref[...], preferred_element_type=jnp.float32)
         + bl_ref[...]
         + jnp.dot(x_self, wr_ref[...], preferred_element_type=jnp.float32))
    h = jnp.maximum(h, 0.0)                                      # ReLU

    # ---- fused Linear head + partial node-sum for the final mean ----
    y = jnp.dot(h, w2_ref[...], preferred_element_type=jnp.float32) + b2_ref[...]
    partial = jnp.sum(y, axis=0, keepdims=True)                  # [1, OUT]

    @pl.when(i == 0)
    def _():
        out_ref[...] = jnp.zeros_like(out_ref)

    out_ref[...] += partial

    @pl.when(i == n_tiles - 1)
    def _():
        out_ref[...] *= jnp.float32(1.0 / n_total)               # mean(dim=0)


# ---------------------------------------------------------------------------
# Wrapper
# ---------------------------------------------------------------------------
def graph_encoder_forward(x, edge_index, params, *, tile=16):
    """x: [N, FIN] f32, edge_index: [2, E] int32 (row0=src, row1=dst)."""
    N, FIN = x.shape
    HID = params["wl"].shape[1]
    OUT = params["w2"].shape[1]
    assert N % tile == 0, "demo assumes N divisible by the target tile"

    src, dst = edge_index[0], edge_index[1]
    # adjacency COUNTS (duplicate edges counted, like PyG scatter-mean); bf16
    # halves the N^2 DMA + VMEM footprint, values are small ints -> exact.
    adj = (jnp.zeros((N, N), jnp.float32).at[dst, src].add(1.0)
           ).astype(jnp.bfloat16)

    grid = (N // tile,)
    out = pl.pallas_call(
        _sage_encoder_kernel,
        out_shape=jax.ShapeDtypeStruct((1, OUT), jnp.float32),
        grid=grid,
        in_specs=[
            pl.BlockSpec((tile, N), lambda i: (i, 0)),      # adj target tile
            pl.BlockSpec((N, FIN), lambda i: (0, 0)),       # x (grid-invariant)
            pl.BlockSpec((FIN, HID), lambda i: (0, 0)),     # wl
            pl.BlockSpec((1, HID), lambda i: (0, 0)),       # bl
            pl.BlockSpec((FIN, HID), lambda i: (0, 0)),     # wr
            pl.BlockSpec((HID, OUT), lambda i: (0, 0)),     # w2
            pl.BlockSpec((1, OUT), lambda i: (0, 0)),       # b2
        ],
        # same block index for every grid step -> VMEM-resident accumulator
        out_specs=pl.BlockSpec((1, OUT), lambda i: (0, 0)),
        compiler_params=pltpu.CompilerParams(
            # the node-tile axis reduces into the mean output -> "arbitrary"
            dimension_semantics=("arbitrary",),
            vmem_limit_bytes=32 * 1024 * 1024,
        ),
    )(adj, x, params["wl"], params["bl"], params["wr"],
      params["w2"], params["b2"])
    return out[0]                                            # [OUT]


# ---------------------------------------------------------------------------
# Pure-JAX reference (edge-list scatter-mean), for a sanity check
# ---------------------------------------------------------------------------
def reference_forward(x, edge_index, params):
    N, FIN = x.shape
    src, dst = edge_index[0], edge_index[1]
    deg = jnp.zeros((N,), jnp.float32).at[dst].add(1.0)
    summ = jnp.zeros((N, FIN), jnp.float32).at[dst].add(x[src])
    agg = jnp.where(deg[:, None] > 0,
                    summ / jnp.maximum(deg[:, None], 1.0), 0.0)
    h = agg @ params["wl"] + params["bl"] + x @ params["wr"]
    h = jnp.maximum(h, 0.0)
    y = h @ params["w2"] + params["b2"]
    return y.mean(axis=0)


# ---------------------------------------------------------------------------
# Deterministic parameter init
# ---------------------------------------------------------------------------
def _glorot(key, shape, fan_in, fan_out):
    lim = jnp.sqrt(6.0 / (fan_in + fan_out))
    return jax.random.uniform(key, shape, jnp.float32, -lim, lim)


def make_params(key, fin, hid, out):
    k1, k2, k3, k4, k5 = jax.random.split(key, 5)
    return {
        "wl": _glorot(k1, (fin, hid), fin, hid),          # SAGEConv lin_l (bias)
        "bl": 0.1 * jax.random.normal(k4, (1, hid), jnp.float32),
        "wr": _glorot(k2, (fin, hid), fin, hid),          # SAGEConv lin_r (no bias)
        "w2": _glorot(k3, (hid, out), hid, out),          # Linear1
        "b2": 0.1 * jax.random.normal(k5, (1, out), jnp.float32),
    }


if __name__ == "__main__":
    N, FIN, HID, OUT = 64, 16, 32, 8
    TILE = 16

    key = jax.random.PRNGKey(0)
    kx, kp = jax.random.split(key, 2)
    x = jax.random.normal(kx, (N, FIN), jnp.float32)

    # deterministic small graph: bidirectional ring (E = 2N)
    idx = jnp.arange(N, dtype=jnp.int32)
    nxt = (idx + 1) % N
    src = jnp.concatenate([idx, nxt])
    dst = jnp.concatenate([nxt, idx])
    edge_index = jnp.stack([src, dst])                    # [2, 128]

    params = make_params(kp, FIN, HID, OUT)

    out = graph_encoder_forward(x, edge_index, params, tile=TILE)
    jax.block_until_ready(out)

    ref = reference_forward(x, edge_index, params)
    assert out.shape == (OUT,)
    # approx reciprocal + bf16 adj -> loose-but-tight-enough tolerance
    assert jnp.allclose(out, ref, rtol=5e-2, atol=5e-2), (out, ref)

    print("KERNEL_OK")
</pallas_src>

<mosaic_0001>
module attributes {stable_mosaic.version = 11 : i64} {
  func.func @_sage_encoder_kernel(%arg0: i32, %arg1: memref<16x64xbf16, #tpu.memory_space<vmem>>, %arg2: memref<64x16xf32, #tpu.memory_space<vmem>>, %arg3: memref<16x32xf32, #tpu.memory_space<vmem>>, %arg4: memref<1x32xf32, #tpu.memory_space<vmem>>, %arg5: memref<16x32xf32, #tpu.memory_space<vmem>>, %arg6: memref<32x8xf32, #tpu.memory_space<vmem>>, %arg7: memref<1x8xf32, #tpu.memory_space<vmem>>, %arg8: memref<1x8xf32, #tpu.memory_space<vmem>>) attributes {dimension_semantics = [#tpu.dimension_semantics<arbitrary>], iteration_bounds = array<i64: 4>, scalar_prefetch = 0 : i64, scratch_operands = 0 : i64, tpu.core_type = #tpu.core_type<tc>, window_params = [{transform_indices = @transform_0, window_bounds = array<i64: 16, 64>}, {pipeline_mode = #tpu.pipeline_mode<synchronous>, transform_indices = @transform_1, window_bounds = array<i64: 64, 16>}, {pipeline_mode = #tpu.pipeline_mode<synchronous>, transform_indices = @transform_2, window_bounds = array<i64: 16, 32>}, {pipeline_mode = #tpu.pipeline_mode<synchronous>, transform_indices = @transform_3, window_bounds = array<i64: 1, 32>}, {pipeline_mode = #tpu.pipeline_mode<synchronous>, transform_indices = @transform_4, window_bounds = array<i64: 16, 32>}, {pipeline_mode = #tpu.pipeline_mode<synchronous>, transform_indices = @transform_5, window_bounds = array<i64: 32, 8>}, {pipeline_mode = #tpu.pipeline_mode<synchronous>, transform_indices = @transform_6, window_bounds = array<i64: 1, 8>}, {pipeline_mode = #tpu.pipeline_mode<synchronous>, transform_indices = @transform_7, window_bounds = array<i64: 1, 8>}]} {
    %c0 = arith.constant 0 : index
    %c0_0 = arith.constant 0 : index
    %0 = vector.load %arg1[%c0, %c0_0] : memref<16x64xbf16, #tpu.memory_space<vmem>>, vector<16x64xbf16>
    %1 = arith.extf %0 : vector<16x64xbf16> to vector<16x64xf32>
    %cst = arith.constant dense<0.000000e+00> : vector<16xf32>
    %2 = vector.multi_reduction <add>, %1, %cst [1] : vector<16x64xf32> to vector<16xf32>
    %3 = vector.shape_cast %2 : vector<16xf32> to vector<16x1xf32>
    %cst_1 = arith.constant 0.000000e+00 : f32
    %4 = vector.broadcast %cst_1 : f32 to vector<16x1xf32>
    %5 = arith.cmpf ogt, %3, %4 : vector<16x1xf32>
    %cst_2 = arith.constant 1.000000e+00 : f32
    %cst_3 = arith.constant 0.000000e+00 : f32
    %6 = vector.broadcast %cst_2 : f32 to vector<16x1xf32>
    %7 = vector.broadcast %cst_3 : f32 to vector<16x1xf32>
    %8 = arith.select %5, %6, %7 : vector<16x1xi1>, vector<16x1xf32>
    %cst_4 = arith.constant 1.000000e+00 : f32
    %9 = vector.broadcast %cst_4 : f32 to vector<16x1xf32>
    %10 = arith.maximumf %3, %9 : vector<16x1xf32>
    %11 = tpu.reciprocal %10 {approx = true} : vector<16x1xf32> -> vector<16x1xf32>
    %12 = arith.mulf %8, %11 : vector<16x1xf32>
    %c0_5 = arith.constant 0 : index
    %c0_6 = arith.constant 0 : index
    %13 = vector.load %arg2[%c0_5, %c0_6] : memref<64x16xf32, #tpu.memory_space<vmem>>, vector<64x16xf32>
    %cst_7 = arith.constant dense<0.000000e+00> : vector<16x16xf32>
    %14 = tpu.matmul %1, %13, %cst_7 {dimension_numbers = #tpu.dot_dimension_numbers<[1], [0], [0], [1], [0, 0, 1, 1], [], []>} : vector<16x64xf32>, vector<64x16xf32>, vector<16x16xf32> -> vector<16x16xf32>
    %15 = vector.broadcast %12 : vector<16x1xf32> to vector<16x16xf32>
    %16 = arith.mulf %14, %15 : vector<16x16xf32>
    %c16_i32 = arith.constant 16 : i32
    %17 = arith.muli %arg0, %c16_i32 : i32
    %18 = tpu.assume_multiple %17, 16 : i32
    %19 = arith.index_cast %18 : i32 to index
    %c0_8 = arith.constant 0 : index
    %20 = vector.load %arg2[%19, %c0_8] : memref<64x16xf32, #tpu.memory_space<vmem>>, vector<16x16xf32>
    %c0_9 = arith.constant 0 : index
    %c0_10 = arith.constant 0 : index
    %21 = vector.load %arg3[%c0_9, %c0_10] : memref<16x32xf32, #tpu.memory_space<vmem>>, vector<16x32xf32>
    %cst_11 = arith.constant dense<0.000000e+00> : vector<16x32xf32>
    %22 = tpu.matmul %16, %21, %cst_11 {dimension_numbers = #tpu.dot_dimension_numbers<[1], [0], [0], [1], [0, 0, 1, 1], [], []>} : vector<16x16xf32>, vector<16x32xf32>, vector<16x32xf32> -> vector<16x32xf32>
    %c0_12 = arith.constant 0 : index
    %c0_13 = arith.constant 0 : index
    %23 = vector.load %arg4[%c0_12, %c0_13] : memref<1x32xf32, #tpu.memory_space<vmem>>, vector<1x32xf32>
    %24 = vector.broadcast %23 : vector<1x32xf32> to vector<16x32xf32>
    %25 = arith.addf %22, %24 : vector<16x32xf32>
    %c0_14 = arith.constant 0 : index
    %c0_15 = arith.constant 0 : index
    %26 = vector.load %arg5[%c0_14, %c0_15] : memref<16x32xf32, #tpu.memory_space<vmem>>, vector<16x32xf32>
    %cst_16 = arith.constant dense<0.000000e+00> : vector<16x32xf32>
    %27 = tpu.matmul %20, %26, %cst_16 {dimension_numbers = #tpu.dot_dimension_numbers<[1], [0], [0], [1], [0, 0, 1, 1], [], []>} : vector<16x16xf32>, vector<16x32xf32>, vector<16x32xf32> -> vector<16x32xf32>
    %28 = arith.addf %25, %27 : vector<16x32xf32>
    %cst_17 = arith.constant 0.000000e+00 : f32
    %29 = vector.broadcast %cst_17 : f32 to vector<16x32xf32>
    %30 = arith.maximumf %28, %29 : vector<16x32xf32>
    %c0_18 = arith.constant 0 : index
    %c0_19 = arith.constant 0 : index
    %31 = vector.load %arg6[%c0_18, %c0_19] : memref<32x8xf32, #tpu.memory_space<vmem>>, vector<32x8xf32>
    %cst_20 = arith.constant dense<0.000000e+00> : vector<16x8xf32>
    %32 = tpu.matmul %30, %31, %cst_20 {dimension_numbers = #tpu.dot_dimension_numbers<[1], [0], [0], [1], [0, 0, 1, 1], [], []>} : vector<16x32xf32>, vector<32x8xf32>, vector<16x8xf32> -> vector<16x8xf32>
    %c0_21 = arith.constant 0 : index
    %c0_22 = arith.constant 0 : index
    %33 = vector.load %arg7[%c0_21, %c0_22] : memref<1x8xf32, #tpu.memory_space<vmem>>, vector<1x8xf32>
    %34 = vector.broadcast %33 : vector<1x8xf32> to vector<16x8xf32>
    %35 = arith.addf %32, %34 : vector<16x8xf32>
    %cst_23 = arith.constant dense<0.000000e+00> : vector<8xf32>
    %36 = vector.multi_reduction <add>, %35, %cst_23 [0] : vector<16x8xf32> to vector<8xf32>
    %37 = vector.shape_cast %36 : vector<8xf32> to vector<1x8xf32>
    %c0_i32 = arith.constant 0 : i32
    %38 = arith.cmpi eq, %arg0, %c0_i32 : i32
    %39 = arith.extui %38 : i1 to i32
    %c0_i32_24 = arith.constant 0 : i32
    %40 = arith.cmpi ne, %39, %c0_i32_24 : i32
    scf.if %40 {
      %cst_30 = arith.constant 0.000000e+00 : f32
      %47 = vector.broadcast %cst_30 : f32 to vector<1x8xf32>
      %c0_31 = arith.constant 0 : index
      %c0_32 = arith.constant 0 : index
      %48 = vector.load %arg8[%c0_31, %c0_32] : memref<1x8xf32, #tpu.memory_space<vmem>>, vector<1x8xf32>
      tpu.vector_store %arg8[%c0_31, %c0_32], %47 {strides = array<i32>} : memref<1x8xf32, #tpu.memory_space<vmem>>, vector<1x8xf32>,
    } else {
    }
    %c0_25 = arith.constant 0 : index
    %c0_26 = arith.constant 0 : index
    %41 = vector.load %arg8[%c0_25, %c0_26] : memref<1x8xf32, #tpu.memory_space<vmem>>, vector<1x8xf32>
    %42 = arith.addf %41, %37 : vector<1x8xf32>
    %c0_27 = arith.constant 0 : index
    %c0_28 = arith.constant 0 : index
    %43 = vector.load %arg8[%c0_27, %c0_28] : memref<1x8xf32, #tpu.memory_space<vmem>>, vector<1x8xf32>
    tpu.vector_store %arg8[%c0_27, %c0_28], %42 {strides = array<i32>} : memref<1x8xf32, #tpu.memory_space<vmem>>, vector<1x8xf32>,
    %c3_i32 = arith.constant 3 : i32
    %44 = arith.cmpi eq, %arg0, %c3_i32 : i32
    %45 = arith.extui %44 : i1 to i32
    %c0_i32_29 = arith.constant 0 : i32
    %46 = arith.cmpi ne, %45, %c0_i32_29 : i32
    scf.if %46 {
      %c0_30 = arith.constant 0 : index
      %c0_31 = arith.constant 0 : index
      %47 = vector.load %arg8[%c0_30, %c0_31] : memref<1x8xf32, #tpu.memory_space<vmem>>, vector<1x8xf32>
      %cst_32 = arith.constant 1.562500e-02 : f32
      %48 = vector.broadcast %cst_32 : f32 to vector<1x8xf32>
      %49 = arith.mulf %47, %48 : vector<1x8xf32>
      %c0_33 = arith.constant 0 : index
      %c0_34 = arith.constant 0 : index
      %50 = vector.load %arg8[%c0_33, %c0_34] : memref<1x8xf32, #tpu.memory_space<vmem>>, vector<1x8xf32>
      tpu.vector_store %arg8[%c0_33, %c0_34], %49 {strides = array<i32>} : memref<1x8xf32, #tpu.memory_space<vmem>>, vector<1x8xf32>,
    } else {
    }
    return
  }
  func.func @transform_0(%arg0: i32) -> (i32, i32) {
    %c0_i32 = arith.constant 0 : i32
    %c0_i32_0 = arith.constant 0 : i32
    return %arg0, %c0_i32 : i32, i32
  }
  func.func @transform_1(%arg0: i32) -> (i32, i32) {
    %c0_i32 = arith.constant 0 : i32
    %c0_i32_0 = arith.constant 0 : i32
    %c0_i32_1 = arith.constant 0 : i32
    return %c0_i32, %c0_i32_0 : i32, i32
  }
  func.func @transform_2(%arg0: i32) -> (i32, i32) {
    %c0_i32 = arith.constant 0 : i32
    %c0_i32_0 = arith.constant 0 : i32
    %c0_i32_1 = arith.constant 0 : i32
    return %c0_i32, %c0_i32_0 : i32, i32
  }
  func.func @transform_3(%arg0: i32) -> (i32, i32) {
    %c0_i32 = arith.constant 0 : i32
    %c0_i32_0 = arith.constant 0 : i32
    %c0_i32_1 = arith.constant 0 : i32
    return %c0_i32, %c0_i32_0 : i32, i32
  }
  func.func @transform_4(%arg0: i32) -> (i32, i32) {
    %c0_i32 = arith.constant 0 : i32
    %c0_i32_0 = arith.constant 0 : i32
    %c0_i32_1 = arith.constant 0 : i32
    return %c0_i32, %c0_i32_0 : i32, i32
  }
  func.func @transform_5(%arg0: i32) -> (i32, i32) {
    %c0_i32 = arith.constant 0 : i32
    %c0_i32_0 = arith.constant 0 : i32
    %c0_i32_1 = arith.constant 0 : i32
    return %c0_i32, %c0_i32_0 : i32, i32
  }
  func.func @transform_6(%arg0: i32) -> (i32, i32) {
    %c0_i32 = arith.constant 0 : i32
    %c0_i32_0 = arith.constant 0 : i32
    %c0_i32_1 = arith.constant 0 : i32
    return %c0_i32, %c0_i32_0 : i32, i32
  }
  func.func @transform_7(%arg0: i32) -> (i32, i32) {
    %c0_i32 = arith.constant 0 : i32
    %c0_i32_0 = arith.constant 0 : i32
    %c0_i32_1 = arith.constant 0 : i32
    return %c0_i32, %c0_i32_0 : i32, i32
  }
}

</mosaic_0001>

<llo_original>
// kernel: tpu_custom_call.1
$region0: #{tpu_custom_call.1}
  #allocation0 [shape = 'u32[]', space=smem, size = 0x4, offset = 0x4, fixed_abs, tag = 'smem constant byte address 0x4 - core index']
  #allocation1 [shape = 'u32[144,128]{1,0:T(1,128)}', space=vmem, size = 0x12000, scoped, tag = 'internal scratch']
  %s0 = inlined_call_operand.vmem [shape: bf16[64,64], index: 0, kind: input, shape index: {}]
  %s1 = inlined_call_operand.vmem [shape: f32[64,16], index: 1, kind: input, shape index: {}]
  %s2 = inlined_call_operand.vmem [shape: f32[16,32], index: 2, kind: input, shape index: {}]
  %s3 = inlined_call_operand.vmem [shape: f32[1,32], index: 3, kind: input, shape index: {}]
  %s4 = inlined_call_operand.vmem [shape: f32[16,32], index: 4, kind: input, shape index: {}]
  %s5 = inlined_call_operand.vmem [shape: f32[32,8], index: 5, kind: input, shape index: {}]
  %s6 = inlined_call_operand.vmem [shape: f32[1,8], index: 6, kind: input, shape index: {}]
  %s7 = inlined_call_operand.hbm [shape: f32[1,8], index: 7, kind: output, shape index: {}]
  %s8 = sld [smem:[#allocation0]]
  $region69: #{tpu_custom_call.1} parent=0
    _
  %s10 = ssub.s32 1, %s8
  %s11 = scalar_select 0, %s10, %s8
  $region1: #{tpu_custom_call.1} parent=0
    #allocation2 [shape = 'u8[512]{0}', space=vmem, size = 0x400, scoped, tag = 'output window, operand 0, single buffered']
    #allocation3 [shape = 's32[2]{0}', space=sflag, size = 0x8, scoped, tag = 'scoped memory for tpu_custom_call.1']
    %12 = vsyncpa [#allocation3], 0
    loop: start=0, step=1, limit=6
    $region2: #{tpu_custom_call.1} parent=1 // loop_pre_header
      _
    $region3: #{tpu_custom_call.1} parent=1 // loop_header
      %s14 = sphi 0, %s18
      %p15 = scmp.ge.s32.totalorder %s14, 6
      %s24 = sphi 0, %s26
      %s27 = sphi 0, %s24
      %s28 = sphi 0, %s27
      %s44 = sphi 0, %s28
      %s48 = sphi 0, %s48
      %s50 = sphi 0, %s48
      %s51 = sphi 0, %s50
      %s65 = sphi 0, %s51
      %s69 = sphi 0, %s69
      %s71 = sphi 0, %s69
      %s72 = sphi 0, %s71
      %s86 = sphi 0, %s72
      %s90 = sphi 0, %s90
      %s92 = sphi 0, %s90
      %s93 = sphi 0, %s92
      %s107 = sphi 0, %s93
      %s111 = sphi 0, %s111
      %s113 = sphi 0, %s111
      %s114 = sphi 0, %s113
      %s128 = sphi 0, %s114
      %s132 = sphi 0, %s132
      %s134 = sphi 0, %s132
      %s135 = sphi 0, %s134
      %s149 = sphi 0, %s135
      %s153 = sphi 0, %s153
      %s155 = sphi 0, %s153
      %s156 = sphi 0, %s155
      %s170 = sphi 0, %s156
      %s174 = sphi 0, %s174
      %s176 = sphi 0, %s174
      %s177 = sphi 0, %s176
      %s191 = sphi 0, %s177
    $region4: #{tpu_custom_call.1} parent=1 // loop_header_branch
      %17 = sbr.rel (%p15) target = $region8
    $region5: #{tpu_custom_call.1} parent=1 // loop_body
      %s19 = ssub.s32 %s14, 1
      %s20 = ssub.s32 %s14, 2
      %s21 = sadd.s32 %s14, 1
      %s22 = ssub.s32 %s14, %s21
      %p23 = scmp.eq.s32.totalorder %s22, 0
      %s25 = sadd.s32 %s24, 1
      %s26 = scalar_select %p23, %s24, %s25
      %p29 = pneg %p23
      %p30 = scmp.eq.s32.totalorder %s14, 3
      %p31 = por %p29, %p30
      %p32 = scmp.ne.s32.totalorder %s24, %s27
      %p33 = scmp.eq.s32.totalorder %s14, 0
      %p34 = por %p32, %p33
      %p35 = scmp.ne.s32.totalorder %s24, %s27
      %p36 = scmp.eq.s32.totalorder %s19, 3
      %p37 = por %p35, %p36
      %p38 = scmp.ne.s32.totalorder %s27, %s28
      %p39 = scmp.eq.s32.totalorder %s19, 0
      %p40 = por %p38, %p39
      %p41 = scmp.ne.s32.totalorder %s27, %s28
      %p42 = scmp.eq.s32.totalorder %s20, 3
      %p43 = por %p41, %p42
      %p45 = scmp.ne.s32.totalorder %s28, %s44
      %p46 = scmp.eq.s32.totalorder %s20, 0
      %p47 = por %p45, %p46
      %s49 = sadd.s32 %s48, 1
      %p52 = scmp.eq.s32.totalorder %s14, 3
      %p53 = scmp.ne.s32.totalorder %s48, %s50
      %p54 = scmp.eq.s32.totalorder %s14, 0
      %p55 = por %p53, %p54
      %p56 = scmp.ne.s32.totalorder %s48, %s50
      %p57 = scmp.eq.s32.totalorder %s19, 3
      %p58 = por %p56, %p57
      %p59 = scmp.ne.s32.totalorder %s50, %s51
      %p60 = scmp.eq.s32.totalorder %s19, 0
      %p61 = por %p59, %p60
      %p62 = scmp.ne.s32.totalorder %s50, %s51
      %p63 = scmp.eq.s32.totalorder %s20, 3
      %p64 = por %p62, %p63
      %p66 = scmp.ne.s32.totalorder %s51, %s65
      %p67 = scmp.eq.s32.totalorder %s20, 0
      %p68 = por %p66, %p67
      %s70 = sadd.s32 %s69, 1
      %p73 = scmp.eq.s32.totalorder %s14, 3
      %p74 = scmp.ne.s32.totalorder %s69, %s71
      %p75 = scmp.eq.s32.totalorder %s14, 0
      %p76 = por %p74, %p75
      %p77 = scmp.ne.s32.totalorder %s69, %s71
      %p78 = scmp.eq.s32.totalorder %s19, 3
      %p79 = por %p77, %p78
      %p80 = scmp.ne.s32.totalorder %s71, %s72
      %p81 = scmp.eq.s32.totalorder %s19, 0
      %p82 = por %p80, %p81
      %p83 = scmp.ne.s32.totalorder %s71, %s72
      %p84 = scmp.eq.s32.totalorder %s20, 3
      %p85 = por %p83, %p84
      %p87 = scmp.ne.s32.totalorder %s72, %s86
      %p88 = scmp.eq.s32.totalorder %s20, 0
      %p89 = por %p87, %p88
      %s91 = sadd.s32 %s90, 1
      %p94 = scmp.eq.s32.totalorder %s14, 3
      %p95 = scmp.ne.s32.totalorder %s90, %s92
      %p96 = scmp.eq.s32.totalorder %s14, 0
      %p97 = por %p95, %p96
      %p98 = scmp.ne.s32.totalorder %s90, %s92
      %p99 = scmp.eq.s32.totalorder %s19, 3
      %p100 = por %p98, %p99
      %p101 = scmp.ne.s32.totalorder %s92, %s93
      %p102 = scmp.eq.s32.totalorder %s19, 0
      %p103 = por %p101, %p102
      %p104 = scmp.ne.s32.totalorder %s92, %s93
      %p105 = scmp.eq.s32.totalorder %s20, 3
      %p106 = por %p104, %p105
      %p108 = scmp.ne.s32.totalorder %s93, %s107
      %p109 = scmp.eq.s32.totalorder %s20, 0
      %p110 = por %p108, %p109
      %s112 = sadd.s32 %s111, 1
      %p115 = scmp.eq.s32.totalorder %s14, 3
      %p116 = scmp.ne.s32.totalorder %s111, %s113
      %p117 = scmp.eq.s32.totalorder %s14, 0
      %p118 = por %p116, %p117
      %p119 = scmp.ne.s32.totalorder %s111, %s113
      %p120 = scmp.eq.s32.totalorder %s19, 3
      %p121 = por %p119, %p120
      %p122 = scmp.ne.s32.totalorder %s113, %s114
      %p123 = scmp.eq.s32.totalorder %s19, 0
      %p124 = por %p122, %p123
      %p125 = scmp.ne.s32.totalorder %s113, %s114
      %p126 = scmp.eq.s32.totalorder %s20, 3
      %p127 = por %p125, %p126
      %p129 = scmp.ne.s32.totalorder %s114, %s128
      %p130 = scmp.eq.s32.totalorder %s20, 0
      %p131 = por %p129, %p130
      %s133 = sadd.s32 %s132, 1
      %p136 = scmp.eq.s32.totalorder %s14, 3
      %p137 = scmp.ne.s32.totalorder %s132, %s134
      %p138 = scmp.eq.s32.totalorder %s14, 0
      %p139 = por %p137, %p138
      %p140 = scmp.ne.s32.totalorder %s132, %s134
      %p141 = scmp.eq.s32.totalorder %s19, 3
      %p142 = por %p140, %p141
      %p143 = scmp.ne.s32.totalorder %s134, %s135
      %p144 = scmp.eq.s32.totalorder %s19, 0
      %p145 = por %p143, %p144
      %p146 = scmp.ne.s32.totalorder %s134, %s135
      %p147 = scmp.eq.s32.totalorder %s20, 3
      %p148 = por %p146, %p147
      %p150 = scmp.ne.s32.totalorder %s135, %s149
      %p151 = scmp.eq.s32.totalorder %s20, 0
      %p152 = por %p150, %p151
      %s154 = sadd.s32 %s153, 1
      %p157 = scmp.eq.s32.totalorder %s14, 3
      %p158 = scmp.ne.s32.totalorder %s153, %s155
      %p159 = scmp.eq.s32.totalorder %s14, 0
      %p160 = por %p158, %p159
      %p161 = scmp.ne.s32.totalorder %s153, %s155
      %p162 = scmp.eq.s32.totalorder %s19, 3
      %p163 = por %p161, %p162
      %p164 = scmp.ne.s32.totalorder %s155, %s156
      %p165 = scmp.eq.s32.totalorder %s19, 0
      %p166 = por %p164, %p165
      %p167 = scmp.ne.s32.totalorder %s155, %s156
      %p168 = scmp.eq.s32.totalorder %s20, 3
      %p169 = por %p167, %p168
      %p171 = scmp.ne.s32.totalorder %s156, %s170
      %p172 = scmp.eq.s32.totalorder %s20, 0
      %p173 = por %p171, %p172
      %s175 = sadd.s32 %s174, 1
      %p178 = scmp.eq.s32.totalorder %s14, 3
      %p179 = scmp.ne.s32.totalorder %s174, %s176
      %p180 = scmp.eq.s32.totalorder %s14, 0
      %p181 = por %p179, %p180
      %p182 = scmp.ne.s32.totalorder %s174, %s176
      %p183 = scmp.eq.s32.totalorder %s19, 3
      %p184 = por %p182, %p183
      %p185 = scmp.ne.s32.totalorder %s176, %s177
      %p186 = scmp.eq.s32.totalorder %s19, 0
      %p187 = por %p185, %p186
      %p188 = scmp.ne.s32.totalorder %s176, %s177
      %p189 = scmp.eq.s32.totalorder %s20, 3
      %p190 = por %p188, %p189
      %p192 = scmp.ne.s32.totalorder %s177, %s191
      %p193 = scmp.eq.s32.totalorder %s20, 0
      %p194 = por %p192, %p193
      %p195 = scmp.le.s32.totalorder 1, %s14
      %p196 = scmp.lt.s32.totalorder %s14, 5
      %p197 = pnand %p195, %p196
      %p198 = pneg %p197
      // Predicated region
      $region9: #{tpu_custom_call.1} parent=5 // pred_check
        _
      $region10: #{tpu_custom_call.1} parent=5 // pred_check_branch
        %200 = sbr.rel (%p197) target = $region12
      $region11: #{tpu_custom_call.1} parent=5 // pred_region
        %s201 = ssub.s32 %s14, 1
        // Predicated region
        $region13: #{tpu_custom_call.1} parent=11 // pred_check
          %p202 = pneg %p61
        $region14: #{tpu_custom_call.1} parent=11 // pred_check_branch
          %204 = sbr.rel (%p202) target = $region16
        $region15: #{tpu_custom_call.1} parent=11 // pred_region
          _
        $region16: #{tpu_custom_call.1} parent=11 // pred_fallthru
          _
        // Predicated region
        $region17: #{tpu_custom_call.1} parent=11 // pred_check
          %p205 = pneg %p82
        $region18: #{tpu_custom_call.1} parent=11 // pred_check_branch
          %207 = sbr.rel (%p205) target = $region20
        $region19: #{tpu_custom_call.1} parent=11 // pred_region
          _
        $region20: #{tpu_custom_call.1} parent=11 // pred_fallthru
          _
        // Predicated region
        $region21: #{tpu_custom_call.1} parent=11 // pred_check
          %p208 = pneg %p103
        $region22: #{tpu_custom_call.1} parent=11 // pred_check_branch
          %210 = sbr.rel (%p208) target = $region24
        $region23: #{tpu_custom_call.1} parent=11 // pred_region
          _
        $region24: #{tpu_custom_call.1} parent=11 // pred_fallthru
          _
        // Predicated region
        $region25: #{tpu_custom_call.1} parent=11 // pred_check
          %p211 = pneg %p124
        $region26: #{tpu_custom_call.1} parent=11 // pred_check_branch
          %213 = sbr.rel (%p211) target = $region28
        $region27: #{tpu_custom_call.1} parent=11 // pred_region
          _
        $region28: #{tpu_custom_call.1} parent=11 // pred_fallthru
          _
        // Predicated region
        $region29: #{tpu_custom_call.1} parent=11 // pred_check
          %p214 = pneg %p145
        $region30: #{tpu_custom_call.1} parent=11 // pred_check_branch
          %216 = sbr.rel (%p214) target = $region32
        $region31: #{tpu_custom_call.1} parent=11 // pred_region
          _
        $region32: #{tpu_custom_call.1} parent=11 // pred_fallthru
          _
        // Predicated region
        $region33: #{tpu_custom_call.1} parent=11 // pred_check
          %p217 = pneg %p166
        $region34: #{tpu_custom_call.1} parent=11 // pred_check_branch
          %219 = sbr.rel (%p217) target = $region36
        $region35: #{tpu_custom_call.1} parent=11 // pred_region
          _
        $region36: #{tpu_custom_call.1} parent=11 // pred_fallthru
          _
      $region12: #{tpu_custom_call.1} parent=5 // pred_fallthru
        _
      %p220 = scmp.lt.s32.totalorder %s14, 4
      // Predicated region
      $region37: #{tpu_custom_call.1} parent=5 // pred_check
        %p221 = pneg %p220
      $region38: #{tpu_custom_call.1} parent=5 // pred_check_branch
        %223 = sbr.rel (%p221) target = $region40
      $region39: #{tpu_custom_call.1} parent=5 // pred_region
        // Predicated region
        $region41: #{tpu_custom_call.1} parent=39 // pred_check
          %p224 = pneg %p34
        $region42: #{tpu_custom_call.1} parent=39 // pred_check_branch
          %226 = sbr.rel (%p224) target = $region44
        $region43: #{tpu_custom_call.1} parent=39 // pred_region
          %s227 = smul.u32 2, %s14
          %p228 = scmp.lt.s32.totalorder %s227, 7
          %s229 = scalar_select %p228, %s227, 7
          %s230 = smul.addr %s229, 4
          %s231 = scalar_lea.vmem %s0, %s230
          %s232 = smul.u32 2, %s14
        $region44: #{tpu_custom_call.1} parent=39 // pred_fallthru
          _
      $region40: #{tpu_custom_call.1} parent=5 // pred_fallthru
        _
      %p233 = scmp.le.s32.totalorder 1, %s14
      %p234 = scmp.lt.s32.totalorder %s14, 5
      %p235 = pnand %p233, %p234
      %p236 = pneg %p235
      // Predicated region
      $region45: #{tpu_custom_call.1} parent=5 // pred_check
        _
      $region46: #{tpu_custom_call.1} parent=5 // pred_check_branch
        %238 = sbr.rel (%p235) target = $region48
      $region47: #{tpu_custom_call.1} parent=5 // pred_region
        %s239 = ssub.s32 %s14, 1
        %s240 = smul.u32 2, %s19
        %p241 = scmp.lt.s32.totalorder %s240, 7
        %s242 = scalar_select %p241, %s240, 7
        %s243 = smul.addr %s242, 4
        %s244 = scalar_lea.vmem %s0, %s243
        %p245 = pneg %p40
        %p246 = pneg %p37
        %p247 = pneg %p61
        %p248 = pneg %p58
        %p249 = pneg %p82
        %p250 = pneg %p79
        %p251 = pneg %p103
        %p252 = pneg %p100
        %p253 = pneg %p124
        %p254 = pneg %p121
        %p255 = pneg %p145
        %p256 = pneg %p142
        %p257 = pneg %p166
        %p258 = pneg %p163
        %p259 = pneg %p187
        %p260 = pneg %p184
        %s261 = smul.u32 2, %s19
        %p262 = scmp.lt.s32.totalorder %s261, 7
        %s263 = scalar_select %p262, %s261, 7
        %s264 = smul.addr %s263, 4
        %s265 = scalar_lea.vmem %s0, %s264
        %s266 = smul.u32 2, %s19
        %v267 = vld [vmem:[%s265] sm:$0xf]
        %v268 = vld [vmem:[%s265 + $0x4] sm:$0xf]
        %v269 = vunpack.c.l.bf16 %v267
        %v270 = vunpack.c.l.bf16 %v268
        %vm271 = vcmask 523264
        %v272 = vsel %vm271, %v269, 0.0
        %273 = vadd.xlane.f32.xlu0 %v272
        %v274 = vpop.xlane.xlu0 %273
        %v275 = vsel %vm271, %v270, 0.0
        %276 = vadd.xlane.f32.xlu0 %v275
        %v277 = vpop.xlane.xlu0 %276
        %vm278 = vcmp.gt.f32.partialorder %v274, 0.0
        %vm279 = vcmp.gt.f32.partialorder %v277, 0.0
        %v280 = vsel %vm278, 1.0, 0.0
        %v281 = vsel %vm279, 1.0, 0.0
        %v282 = vmax.f32 %v274, 1.0
        %v283 = vmax.f32 %v277, 1.0
        %v284 = vrcp.pop %v282
        %v285 = vrcp.pop %v283
        %v286 = vmul.f32 %v280, %v284
        %v287 = vmul.f32 %v281, %v285
        %v288 = vld [vmem:[%s1] sm:$0xff]
        %v289 = vld [vmem:[%s1 + $0x8] sm:$0xff]
        %v290 = vld [vmem:[%s1 + $0x10] sm:$0xff]
        %v291 = vld [vmem:[%s1 + $0x18] sm:$0xff]
        %v292 = vld [vmem:[%s1 + $0x20] sm:$0xff]
        %v293 = vld [vmem:[%s1 + $0x28] sm:$0xff]
        %v294 = vld [vmem:[%s1 + $0x30] sm:$0xff]
        %v295 = vld [vmem:[%s1 + $0x38] sm:$0xff]
        %v297 = vsel %vm271, %v269, 0
        %v300 = vsel %vm271, %v270, 0
        %302 = vmatprep.subr.mxu0 0.0
        %303 = vmatpush1.msra.mxu0 0.0
        %304 = vmatprep.subr.mxu0 0.0
        %305 = vmatpush1.msra.mxu0 0.0
        %306 = vmatprep.subr.mxu0 0.0
        %307 = vmatpush1.msra.mxu0 0.0
        %308 = vmatprep.subr.mxu0 0.0
        %309 = vmatpush1.msra.mxu0 0.0
        %310 = vmatprep.subr.mxu0 0.0
        %311 = vmatpush1.msra.mxu0 0.0
        %312 = vmatprep.subr.mxu0 0.0
        %313 = vmatpush1.msra.mxu0 0.0
        %314 = vmatprep.subr.mxu0 0.0
        %315 = vmatpush1.msra.mxu0 0.0
        %316 = vmatprep.subr.mxu0 0.0
        %317 = vmatpush1.msra.mxu0 0.0
        %318 = vmatprep.subr.mxu0 0.0
        %319 = vmatpush1.msra.mxu0 %v295
        %320 = vmatprep.subr.mxu0 0.0
        %321 = vmatpush1.msra.mxu0 %v294
        %322 = vmatprep.subr.mxu0 0.0
        %323 = vmatpush1.msra.mxu0 %v293
        %324 = vmatprep.subr.mxu0 0.0
        %325 = vmatpush1.msra.mxu0 %v292
        %326 = vmatprep.subr.mxu0 0.0
        %327 = vmatpush1.msra.mxu0 %v291
        %328 = vmatprep.subr.mxu0 0.0
        %329 = vmatpush1.msra.mxu0 %v290
        %330 = vmatprep.subr.mxu0 0.0
        %331 = vmatpush1.msra.mxu0 %v289
        %332 = vmatprep.subr.mxu0 0.0
        %333 = vmatpush1.msra.mxu0 %v288
        %334 = vmatprep.subr.mxu0 0.0
        %335 = vmatpush2.msra.mxu0 0.0
        %336 = vmatprep.subr.mxu0 0.0
        %337 = vmatpush2.msra.mxu0 0.0
        %338 = vmatprep.subr.mxu0 0.0
        %339 = vmatpush2.msra.mxu0 0.0
        %340 = vmatprep.subr.mxu0 0.0
        %341 = vmatpush2.msra.mxu0 0.0
        %342 = vmatprep.subr.mxu0 0.0
        %343 = vmatpush2.msra.mxu0 0.0
        %344 = vmatprep.subr.mxu0 0.0
        %345 = vmatpush2.msra.mxu0 0.0
        %346 = vmatprep.subr.mxu0 0.0
        %347 = vmatpush2.msra.mxu0 0.0
        %348 = vmatprep.subr.mxu0 0.0
        %349 = vmatpush2.msra.mxu0 0.0
        %350 = vmatprep.subr.mxu0 0.0
        %351 = vmatpush2.msra.mxu0 0.0
        %352 = vmatprep.subr.mxu0 0.0
        %353 = vmatpush2.msra.mxu0 0.0
        %354 = vmatprep.subr.mxu0 0.0
        %355 = vmatpush2.msra.mxu0 0.0
        %356 = vmatprep.subr.mxu0 0.0
        %357 = vmatpush2.msra.mxu0 0.0
        %358 = vmatprep.subr.mxu0 0.0
        %359 = vmatpush2.msra.mxu0 0.0
        %360 = vmatprep.subr.mxu0 0.0
        %361 = vmatpush2.msra.mxu0 0.0
        %362 = vmatprep.subr.mxu0 0.0
        %363 = vmatpush2.msra.mxu0 0.0
        %364 = vmatprep.subr.mxu0 0.0
        %365 = vmatpush2.msra.mxu0 0.0
        %366 = vmatprep.mubr.f32.mxu0 0.0
        %367 = vmatmul.mubr.f32.gmra.mxu0 %v297
        %v368 = vpop.f32.mrf.mxu0
        %v369 = vadd.f32 0.0, %v368
        %v370 = vpop.f32.mrf.mxu0
        %371 = vmatprep.mubr.f32.mxu0 0.0
        %372 = vmatmul.mubr.f32.gmra.mxu0 %v300
        %v373 = vpop.f32.mrf.mxu0
        %v374 = vadd.f32 0.0, %v373
        %v375 = vpop.f32.mrf.mxu0
        %376 = vdwg.mxu0
        %v377 = vmul.f32 %v369, %v286
        %v378 = vmul.f32 %v374, %v287
        %s379 = smul.u32 %s19, 16
        %s380 = scalar_lea.vmem %s1, %s379
        %v381 = vld [vmem:[%s380] sm:$0xff]
        %v382 = vld [vmem:[%s380 + $0x8] sm:$0xff]
        %v383 = vld [vmem:[%s2] sm:$0xff]
        %v384 = vld [vmem:[%s2 + $0x8] sm:$0xff]
        %v385 = vld [vmem:[%s3] sm:$0x1]
        %v387 = vlaneseq
        %v388 = vshrl.u32 %v387, 7
        %v389 = vsub.s32 0, %v388
        %v390 = vrot.slane %v385, %v389
        %vm392 = vcmask 130048
        %v394 = vsel %vm392, %v377, 0
        %v397 = vsel %vm392, %v378, 0
        %399 = vmatprep.subr.mxu0 0.0
        %400 = vmatpush1.msra.mxu0 0.0
        %401 = vmatprep.subr.mxu0 0.0
        %402 = vmatpush1.msra.mxu0 0.0
        %403 = vmatprep.subr.mxu0 0.0
        %404 = vmatpush1.msra.mxu0 0.0
        %405 = vmatprep.subr.mxu0 0.0
        %406 = vmatpush1.msra.mxu0 0.0
        %407 = vmatprep.subr.mxu0 0.0
        %408 = vmatpush1.msra.mxu0 0.0
        %409 = vmatprep.subr.mxu0 0.0
        %410 = vmatpush1.msra.mxu0 0.0
        %411 = vmatprep.subr.mxu0 0.0
        %412 = vmatpush1.msra.mxu0 0.0
        %413 = vmatprep.subr.mxu0 0.0
        %414 = vmatpush1.msra.mxu0 0.0
        %415 = vmatprep.subr.mxu0 0.0
        %416 = vmatpush1.msra.mxu0 0.0
        %417 = vmatprep.subr.mxu0 0.0
        %418 = vmatpush1.msra.mxu0 0.0
        %419 = vmatprep.subr.mxu0 0.0
        %420 = vmatpush1.msra.mxu0 0.0
        %421 = vmatprep.subr.mxu0 0.0
        %422 = vmatpush1.msra.mxu0 0.0
        %423 = vmatprep.subr.mxu0 0.0
        %424 = vmatpush1.msra.mxu0 0.0
        %425 = vmatprep.subr.mxu0 0.0
        %426 = vmatpush1.msra.mxu0 0.0
        %427 = vmatprep.subr.mxu0 0.0
        %428 = vmatpush1.msra.mxu0 %v384
        %429 = vmatprep.subr.mxu0 0.0
        %430 = vmatpush1.msra.mxu0 %v383
        %431 = vmatprep.subr.mxu0 0.0
        %432 = vmatpush2.msra.mxu0 0.0
        %433 = vmatprep.subr.mxu0 0.0
        %434 = vmatpush2.msra.mxu0 0.0
        %435 = vmatprep.subr.mxu0 0.0
        %436 = vmatpush2.msra.mxu0 0.0
        %437 = vmatprep.subr.mxu0 0.0
        %438 = vmatpush2.msra.mxu0 0.0
        %439 = vmatprep.subr.mxu0 0.0
        %440 = vmatpush2.msra.mxu0 0.0
        %441 = vmatprep.subr.mxu0 0.0
        %442 = vmatpush2.msra.mxu0 0.0
        %443 = vmatprep.subr.mxu0 0.0
        %444 = vmatpush2.msra.mxu0 0.0
        %445 = vmatprep.subr.mxu0 0.0
        %446 = vmatpush2.msra.mxu0 0.0
        %447 = vmatprep.subr.mxu0 0.0
        %448 = vmatpush2.msra.mxu0 0.0
        %449 = vmatprep.subr.mxu0 0.0
        %450 = vmatpush2.msra.mxu0 0.0
        %451 = vmatprep.subr.mxu0 0.0
        %452 = vmatpush2.msra.mxu0 0.0
        %453 = vmatprep.subr.mxu0 0.0
        %454 = vmatpush2.msra.mxu0 0.0
        %455 = vmatprep.subr.mxu0 0.0
        %456 = vmatpush2.msra.mxu0 0.0
        %457 = vmatprep.subr.mxu0 0.0
        %458 = vmatpush2.msra.mxu0 0.0
        %459 = vmatprep.subr.mxu0 0.0
        %460 = vmatpush2.msra.mxu0 0.0
        %461 = vmatprep.subr.mxu0 0.0
        %462 = vmatpush2.msra.mxu0 0.0
        %463 = vmatprep.mubr.f32.mxu0 0.0
        %464 = vmatmul.mubr.f32.gmra.mxu0 %v394
        %v465 = vpop.f32.mrf.mxu0
        %v466 = vadd.f32 %v390, %v465
        %v467 = vpop.f32.mrf.mxu0
        %468 = vmatprep.mubr.f32.mxu0 0.0
        %469 = vmatmul.mubr.f32.gmra.mxu0 %v397
        %v470 = vpop.f32.mrf.mxu0
        %v471 = vadd.f32 %v390, %v470
        %v472 = vpop.f32.mrf.mxu0
        %473 = vdwg.mxu0
        %v474 = vld [vmem:[%s4] sm:$0xff]
        %v475 = vld [vmem:[%s4 + $0x8] sm:$0xff]
        %v477 = vsel %vm392, %v381, 0
        %v480 = vsel %vm392, %v382, 0
        %482 = vmatprep.subr.mxu0 0.0
        %483 = vmatpush1.msra.mxu0 0.0
        %484 = vmatprep.subr.mxu0 0.0
        %485 = vmatpush1.msra.mxu0 0.0
        %486 = vmatprep.subr.mxu0 0.0
        %487 = vmatpush1.msra.mxu0 0.0
        %488 = vmatprep.subr.mxu0 0.0
        %489 = vmatpush1.msra.mxu0 0.0
        %490 = vmatprep.subr.mxu0 0.0
        %491 = vmatpush1.msra.mxu0 0.0
        %492 = vmatprep.subr.mxu0 0.0
        %493 = vmatpush1.msra.mxu0 0.0
        %494 = vmatprep.subr.mxu0 0.0
        %495 = vmatpush1.msra.mxu0 0.0
        %496 = vmatprep.subr.mxu0 0.0
        %497 = vmatpush1.msra.mxu0 0.0
        %498 = vmatprep.subr.mxu0 0.0
        %499 = vmatpush1.msra.mxu0 0.0
        %500 = vmatprep.subr.mxu0 0.0
        %501 = vmatpush1.msra.mxu0 0.0
        %502 = vmatprep.subr.mxu0 0.0
        %503 = vmatpush1.msra.mxu0 0.0
        %504 = vmatprep.subr.mxu0 0.0
        %505 = vmatpush1.msra.mxu0 0.0
        %506 = vmatprep.subr.mxu0 0.0
        %507 = vmatpush1.msra.mxu0 0.0
        %508 = vmatprep.subr.mxu0 0.0
        %509 = vmatpush1.msra.mxu0 0.0
        %510 = vmatprep.subr.mxu0 0.0
        %511 = vmatpush1.msra.mxu0 %v475
        %512 = vmatprep.subr.mxu0 0.0
        %513 = vmatpush1.msra.mxu0 %v474
        %514 = vmatprep.subr.mxu0 0.0
        %515 = vmatpush2.msra.mxu0 0.0
        %516 = vmatprep.subr.mxu0 0.0
        %517 = vmatpush2.msra.mxu0 0.0
        %518 = vmatprep.subr.mxu0 0.0
        %519 = vmatpush2.msra.mxu0 0.0
        %520 = vmatprep.subr.mxu0 0.0
        %521 = vmatpush2.msra.mxu0 0.0
        %522 = vmatprep.subr.mxu0 0.0
        %523 = vmatpush2.msra.mxu0 0.0
        %524 = vmatprep.subr.mxu0 0.0
        %525 = vmatpush2.msra.mxu0 0.0
        %526 = vmatprep.subr.mxu0 0.0
        %527 = vmatpush2.msra.mxu0 0.0
        %528 = vmatprep.subr.mxu0 0.0
        %529 = vmatpush2.msra.mxu0 0.0
        %530 = vmatprep.subr.mxu0 0.0
        %531 = vmatpush2.msra.mxu0 0.0
        %532 = vmatprep.subr.mxu0 0.0
        %533 = vmatpush2.msra.mxu0 0.0
        %534 = vmatprep.subr.mxu0 0.0
        %535 = vmatpush2.msra.mxu0 0.0
        %536 = vmatprep.subr.mxu0 0.0
        %537 = vmatpush2.msra.mxu0 0.0
        %538 = vmatprep.subr.mxu0 0.0
        %539 = vmatpush2.msra.mxu0 0.0
        %540 = vmatprep.subr.mxu0 0.0
        %541 = vmatpush2.msra.mxu0 0.0
        %542 = vmatprep.subr.mxu0 0.0
        %543 = vmatpush2.msra.mxu0 0.0
        %544 = vmatprep.subr.mxu0 0.0
        %545 = vmatpush2.msra.mxu0 0.0
        %546 = vmatprep.mubr.f32.mxu0 0.0
        %547 = vmatmul.mubr.f32.gmra.mxu0 %v477
        %v548 = vpop.f32.mrf.mxu0
        %v549 = vadd.f32 0.0, %v548
        %v550 = vpop.f32.mrf.mxu0
        %551 = vmatprep.mubr.f32.mxu0 0.0
        %552 = vmatmul.mubr.f32.gmra.mxu0 %v480
        %v553 = vpop.f32.mrf.mxu0
        %v554 = vadd.f32 0.0, %v553
        %v555 = vpop.f32.mrf.mxu0
        %556 = vdwg.mxu0
        %v557 = vadd.f32 %v466, %v549
        %v558 = vadd.f32 %v471, %v554
        %v559 = vmax.f32 %v557, 0.0
        %v560 = vmax.f32 %v558, 0.0
        %v561 = vld [vmem:[%s5] sm:$0xff]
        %v562 = vld [vmem:[%s5 + $0x8] sm:$0xff]
        %v563 = vld [vmem:[%s5 + $0x10] sm:$0xff]
        %v564 = vld [vmem:[%s5 + $0x18] sm:$0xff]
        %v565 = vld [vmem:[%s6] sm:$0x1]
        %v567 = vlaneseq
        %v568 = vshrl.u32 %v567, 7
        %v569 = vsub.s32 0, %v568
        %v570 = vrot.slane %v565, %v569
        %vm572 = vcmask 261120
        %v574 = vsel %vm572, %v559, 0
        %v577 = vsel %vm572, %v560, 0
        %579 = vmatprep.subr.mxu0 0.0
        %580 = vmatpush1.msra.mxu0 0.0
        %581 = vmatprep.subr.mxu0 0.0
        %582 = vmatpush1.msra.mxu0 0.0
        %583 = vmatprep.subr.mxu0 0.0
        %584 = vmatpush1.msra.mxu0 0.0
        %585 = vmatprep.subr.mxu0 0.0
        %586 = vmatpush1.msra.mxu0 0.0
        %587 = vmatprep.subr.mxu0 0.0
        %588 = vmatpush1.msra.mxu0 0.0
        %589 = vmatprep.subr.mxu0 0.0
        %590 = vmatpush1.msra.mxu0 0.0
        %591 = vmatprep.subr.mxu0 0.0
        %592 = vmatpush1.msra.mxu0 0.0
        %593 = vmatprep.subr.mxu0 0.0
        %594 = vmatpush1.msra.mxu0 0.0
        %595 = vmatprep.subr.mxu0 0.0
        %596 = vmatpush1.msra.mxu0 0.0
        %597 = vmatprep.subr.mxu0 0.0
        %598 = vmatpush1.msra.mxu0 0.0
        %599 = vmatprep.subr.mxu0 0.0
        %600 = vmatpush1.msra.mxu0 0.0
        %601 = vmatprep.subr.mxu0 0.0
        %602 = vmatpush1.msra.mxu0 0.0
        %603 = vmatprep.subr.mxu0 0.0
        %604 = vmatpush1.msra.mxu0 %v564
        %605 = vmatprep.subr.mxu0 0.0
        %606 = vmatpush1.msra.mxu0 %v563
        %607 = vmatprep.subr.mxu0 0.0
        %608 = vmatpush1.msra.mxu0 %v562
        %609 = vmatprep.subr.mxu0 0.0
        %610 = vmatpush1.msra.mxu0 %v561
        %611 = vmatprep.subr.mxu0 0.0
        %612 = vmatpush2.msra.mxu0 0.0
        %613 = vmatprep.subr.mxu0 0.0
        %614 = vmatpush2.msra.mxu0 0.0
        %615 = vmatprep.subr.mxu0 0.0
        %616 = vmatpush2.msra.mxu0 0.0
        %617 = vmatprep.subr.mxu0 0.0
        %618 = vmatpush2.msra.mxu0 0.0
        %619 = vmatprep.subr.mxu0 0.0
        %620 = vmatpush2.msra.mxu0 0.0
        %621 = vmatprep.subr.mxu0 0.0
        %622 = vmatpush2.msra.mxu0 0.0
        %623 = vmatprep.subr.mxu0 0.0
        %624 = vmatpush2.msra.mxu0 0.0
        %625 = vmatprep.subr.mxu0 0.0
        %626 = vmatpush2.msra.mxu0 0.0
        %627 = vmatprep.subr.mxu0 0.0
        %628 = vmatpush2.msra.mxu0 0.0
        %629 = vmatprep.subr.mxu0 0.0
        %630 = vmatpush2.msra.mxu0 0.0
        %631 = vmatprep.subr.mxu0 0.0
        %632 = vmatpush2.msra.mxu0 0.0
        %633 = vmatprep.subr.mxu0 0.0
        %634 = vmatpush2.msra.mxu0 0.0
        %635 = vmatprep.subr.mxu0 0.0
        %636 = vmatpush2.msra.mxu0 0.0
        %637 = vmatprep.subr.mxu0 0.0
        %638 = vmatpush2.msra.mxu0 0.0
        %639 = vmatprep.subr.mxu0 0.0
        %640 = vmatpush2.msra.mxu0 0.0
        %641 = vmatprep.subr.mxu0 0.0
        %642 = vmatpush2.msra.mxu0 0.0
        %643 = vmatprep.mubr.f32.mxu0 0.0
        %644 = vmatmul.mubr.f32.gmra.mxu0 %v574
        %v645 = vpop.f32.mrf.mxu0
        %v646 = vadd.f32 %v570, %v645
        %v647 = vpop.f32.mrf.mxu0
        %648 = vmatprep.mubr.f32.mxu0 0.0
        %649 = vmatmul.mubr.f32.gmra.mxu0 %v577
        %v650 = vpop.f32.mrf.mxu0
        %v651 = vadd.f32 %v570, %v650
        %v652 = vpop.f32.mrf.mxu0
        %653 = vdwg.mxu0
        %vm654 = vcmask 64512
        %v655 = vsel %vm654, %v646, 0.0
        %v656 = vsel %vm654, %v651, 0.0
        %v657 = vadd.f32 %v655, %v656
        %v658 = vrot.slane %v657, 4
        %v659 = vadd.f32 %v657, %v658
        %v660 = vrot.slane %v659, 2
        %v661 = vadd.f32 %v659, %v660
        %v662 = vrot.slane %v661, 1
        %v663 = vadd.f32 %v661, %v662
        %p664 = scmp.eq.s32.totalorder %s19, 0
        // Predicated region
        $region49: #{tpu_custom_call.1} parent=47 // pred_check
          %p665 = pneg %p664
        $region50: #{tpu_custom_call.1} parent=47 // pred_check_branch
          %667 = sbr.rel (%p665) target = $region52
        $region51: #{tpu_custom_call.1} parent=47 // pred_region
          %vm668 = vcmask 57344
          %669 = vst.msk [vmem:[#allocation2] sm:$0x1] %vm668, 0.0
        $region52: #{tpu_custom_call.1} parent=47 // pred_fallthru
          _
        %v670 = vld [vmem:[#allocation2] sm:$0x1]
        %v671 = vadd.f32 %v670, %v663
        %vm672 = vcmask 57344
        %673 = vst.msk [vmem:[#allocation2] sm:$0x1] %vm672, %v671
        %p674 = scmp.eq.s32.totalorder %s19, 3
        // Predicated region
        $region53: #{tpu_custom_call.1} parent=47 // pred_check
          %p675 = pneg %p674
        $region54: #{tpu_custom_call.1} parent=47 // pred_check_branch
          %677 = sbr.rel (%p675) target = $region56
        $region55: #{tpu_custom_call.1} parent=47 // pred_region
          %v678 = vld [vmem:[#allocation2] sm:$0x1]
          %v679 = vmul.f32 %v678, 0.015625
          %680 = vst.msk [vmem:[#allocation2] sm:$0x1] %vm672, %v679
        $region56: #{tpu_custom_call.1} parent=47 // pred_fallthru
          _
        // Predicated region
        $region57: #{tpu_custom_call.1} parent=47 // pred_check
          %p681 = pneg %p184
        $region58: #{tpu_custom_call.1} parent=47 // pred_check_branch
          %683 = sbr.rel (%p681) target = $region60
        $region59: #{tpu_custom_call.1} parent=47 // pred_region
          %s685 = ssub.s32 16, 16
          %686 = vsyncadd [#allocation3], %s685
          %s688 = sshll.u32 [#allocation2], 4
          %s689 = int_to_ptr.vmem [resolvable:$true] %s688
          %691 = dma.vmem_to_hbm [thread:$0]  %s689, 16, %s7, [#allocation3]
        $region60: #{tpu_custom_call.1} parent=47 // pred_fallthru
          _
        // Predicated region
        $region61: #{tpu_custom_call.1} parent=47 // pred_check
          %p692 = pneg %p184
        $region62: #{tpu_custom_call.1} parent=47 // pred_check_branch
          %694 = sbr.rel (%p692) target = $region64
        $region63: #{tpu_custom_call.1} parent=47 // pred_region
          %695 = dma.done [#allocation3], 16
        $region64: #{tpu_custom_call.1} parent=47 // pred_fallthru
          _
      $region48: #{tpu_custom_call.1} parent=5 // pred_fallthru
        _
      %p696 = scmp.le.s32.totalorder 2, %s14
      // Predicated region
      $region65: #{tpu_custom_call.1} parent=5 // pred_check
        %p697 = pneg %p696
      $region66: #{tpu_custom_call.1} parent=5 // pred_check_branch
        %699 = sbr.rel (%p697) target = $region68
      $region67: #{tpu_custom_call.1} parent=5 // pred_region
        %s700 = ssub.s32 %s14, 2
      $region68: #{tpu_custom_call.1} parent=5 // pred_fallthru
        _
    $region6: #{tpu_custom_call.1} parent=1 // loop_footer
      %s18 = sadd.s32 1, %s14
    $region7: #{tpu_custom_call.1} parent=1 // loop_footer_branch
      %13 = sbr.rel target = $region3
    $region8: #{tpu_custom_call.1} parent=1 // loop_exit
      _
    %701 = vsyncpa [#allocation3], 1
    %s702 = scalar_lea.sflag [#allocation3], 1
    %703 = vsyncpa %s702, 1

</llo_original>
